<compile_context>
chip_gen: v7x
topology: tpu7x:2x2x1
jax: 0.10.0
libtpu: 0.0.40
codegen_flags: <defaults>
</compile_context>

<pallas_src>
import functools
import math

import jax
import jax.numpy as jnp
import numpy as np
from jax.experimental import pallas as pl
from jax.experimental.pallas import tpu as pltpu

_TARGET_BLOCK_BYTES = 2 * 1024 * 1024    # ~2 MiB output per block (review: 1-4 MiB)
_TARGET_LANES = 128                      # fold rows until the last dim is >= 128
_MIN_PALLAS_BYTES = 2 * 1024 * 1024      # below this, the fused XLA path wins


def _round_up(n, m):
    return ((n + m - 1) // m) * m


@functools.lru_cache(maxsize=None)
def _freq_phase_table(dim, fold):
    """(fold+1, fold*dim) table.

    Rows 0..fold-1: freq_full placed in that fold-slot's dim-wide lane range,
    zeros elsewhere (disjoint supports -> summing broadcast-multiplies is exact).
    Row fold: phase = [0...0 | pi/2...pi/2] tiled fold times.
    Cached so the host-side table is not rebuilt per call.
    """
    half = dim // 2
    scale = math.log(10000.0) / (half - 1)
    freqs = np.exp(np.arange(half, dtype=np.float32) * -scale)          # (half,)
    freq_full = np.concatenate([freqs, freqs])                          # (dim,)
    phase = np.concatenate([np.zeros(half, np.float32),
                            np.full(half, 0.5 * math.pi, np.float32)])  # (dim,)
    w = fold * dim
    tab = np.zeros((fold + 1, w), np.float32)
    for j in range(fold):
        tab[j, j * dim:(j + 1) * dim] = freq_full
    tab[fold, :] = np.tile(phase, fold)
    return jnp.asarray(tab)


def _sinusoidal_kernel(x_ref, tab_ref, out_ref, *, fold):
    # x_ref:   (tile, fold)           positions, `fold` consecutive rows per output row
    # tab_ref: (fold+1, W=fold*dim)   resident freq/phase table
    # out_ref: (tile, W)              [sin | cos] for the fold rows, lane-packed
    x = x_ref[...]
    tab = tab_ref[...]
    # Lane expansion of x (each position -> its dim-wide lane slot) via `fold`
    # broadcast-multiplies against disjoint-support freq rows.  Exact f32 math,
    # no reshape/gather; the extra VALU madds are small next to the sin polynomial.
    arg = x[:, 0:1] * tab[0:1, :]
    for j in range(1, fold):                       # unrolled at trace time (fold <= 32)
        arg = arg + x[:, j:j + 1] * tab[j:j + 1, :]
    # sin(a + pi/2) == cos(a): a single lane-dense sin over the full width.
    out_ref[...] = jnp.sin(arg + tab[fold:fold + 1, :]).astype(out_ref.dtype)


def sinusoidal_pos_emb(x, dim, *, out_dtype=jnp.float32,
                       block_bytes=_TARGET_BLOCK_BYTES, use_pallas=None):
    """Pallas equivalent of SinusoidalPosEmb(dim)(x).

    x:   (B,) positions / timesteps (any real or integer dtype).
    dim: embedding width (even, >= 4).
    returns: (B, dim) out_dtype array, [sin | cos] along the last axis.
    """
    assert dim % 2 == 0, "dim must be even"
    assert dim >= 4, "dim must be >= 4 (half_dim - 1 == 0 divides by zero)"

    B = x.shape[0]
    x_f32 = x.astype(jnp.float32)
    elem = jnp.dtype(out_dtype).itemsize

    if use_pallas is None:
        # Byte-based gate: below a few MiB of output, pallas_call launch overhead
        # dominates and the fused XLA expression is faster on every generation.
        use_pallas = B * dim * elem >= _MIN_PALLAS_BYTES
    if not use_pallas:
        tab = _freq_phase_table(dim, 1)
        return jnp.sin(x_f32[:, None] * tab[0:1, :] + tab[1:2, :]).astype(out_dtype)

    # ---- lane folding: make the stored last dim >= 128 whenever dim < 128 ----
    fold = 1
    if dim < _TARGET_LANES:
        fold = max(1, _TARGET_LANES // dim)
        while fold > 1 and B % fold != 0:   # only fold exactly (no output re-slice)
            fold -= 1
    rows = B // fold                        # folded row count
    width = fold * dim                      # folded (lane) width
    x2 = x_f32.reshape(rows, fold)
    tab = _freq_phase_table(dim, fold)

    # ---- byte-targeted row tile (multiple of 8 sublanes) ----
    # ~2 MiB blocks double-buffer to ~4 MiB: fits v5e's 16 MiB default scoped VMEM
    # and v7x's 32 MiB (64 MiB physical), and any output >= ~8 MiB still yields
    # several grid steps so the "parallel" axis can split across v7x's two TCs.
    tile = max(8, (block_bytes // (width * elem)) // 8 * 8)
    if tile > rows:
        tile = rows                         # single block == full (ragged) row dim

    grid = (pl.cdiv(rows, tile),)           # ragged last block: Pallas masks OOB stores
    out = pl.pallas_call(
        functools.partial(_sinusoidal_kernel, fold=fold),
        out_shape=jax.ShapeDtypeStruct((rows, width), out_dtype),
        grid=grid,
        in_specs=[
            pl.BlockSpec((tile, fold), lambda i: (i, 0)),        # row tile of positions
            pl.BlockSpec((fold + 1, width), lambda i: (0, 0)),   # resident freq/phase table
        ],
        out_specs=pl.BlockSpec((tile, width), lambda i: (i, 0)),
        compiler_params=pltpu.CompilerParams(
            dimension_semantics=("parallel",),  # independent row tiles -> TC split on v7x
        ),
    )(x2, tab)

    # Contiguous row-major reshape back to (B, dim): layout-compatible, no HBM copy.
    return out.reshape(B, dim)


def _reference(x, dim):
    # Pure-JAX reference mirroring the PyTorch forward exactly.
    half_dim = dim // 2
    scale = math.log(10000.0) / (half_dim - 1)
    emb = jnp.exp(jnp.arange(half_dim, dtype=jnp.float32) * -scale)
    emb = x.astype(jnp.float32)[:, None] * emb[None, :]
    return jnp.concatenate([jnp.sin(emb), jnp.cos(emb)], axis=-1)


if __name__ == "__main__":
    key = jax.random.PRNGKey(0)
    k1, k2, k3 = jax.random.split(key, 3)

    # Case 1: dim < 128 -> lane folding (fold=4, width=128), single block.
    B1, dim1 = 8, 32
    x1 = jax.random.uniform(k1, (B1,), dtype=jnp.float32, minval=0.0, maxval=100.0)
    out1 = sinusoidal_pos_emb(x1, dim1, use_pallas=True)
    jax.block_until_ready(out1)
    ref1 = _reference(x1, dim1)
    assert out1.shape == (B1, dim1) and out1.dtype == jnp.float32
    assert jnp.allclose(out1, ref1, atol=1e-4, rtol=1e-4), "mismatch vs reference (case 1)"

    # Case 2: non-multiple-of-8 batch, dim=64 -> fold=2 (width=128), 25-row block.
    B2, dim2 = 50, 64
    x2 = jax.random.uniform(k2, (B2,), dtype=jnp.float32, minval=0.0, maxval=100.0)
    out2 = sinusoidal_pos_emb(x2, dim2, use_pallas=True)
    jax.block_until_ready(out2)
    ref2 = _reference(x2, dim2)
    assert out2.shape == (B2, dim2) and out2.dtype == jnp.float32
    assert jnp.allclose(out2, ref2, atol=1e-4, rtol=1e-4), "mismatch vs reference (case 2)"

    # Case 3: dim >= 128 (no fold), small block_bytes -> multi-step grid with a
    # ragged last block handled by Pallas store masking (no pad, no out[:B] slice).
    B3, dim3 = 300, 128
    x3 = jax.random.uniform(k3, (B3,), dtype=jnp.float32, minval=0.0, maxval=100.0)
    out3 = sinusoidal_pos_emb(x3, dim3, block_bytes=64 * 1024, use_pallas=True)
    jax.block_until_ready(out3)
    ref3 = _reference(x3, dim3)
    assert out3.shape == (B3, dim3) and out3.dtype == jnp.float32
    assert jnp.allclose(out3, ref3, atol=1e-4, rtol=1e-4), "mismatch vs reference (case 3)"

    # Case 4: optional bf16 store (v5e lever): f32 compute, halved writeback bytes.
    out4 = sinusoidal_pos_emb(x1, dim1, out_dtype=jnp.bfloat16, use_pallas=True)
    jax.block_until_ready(out4)
    assert out4.shape == (B1, dim1) and out4.dtype == jnp.bfloat16
    assert jnp.allclose(out4.astype(jnp.float32), ref1, atol=2e-2, rtol=2e-2), \
        "mismatch vs reference (case 4, bf16)"

    print("KERNEL_OK")
</pallas_src>

<mosaic_0001>
module attributes {stable_mosaic.version = 11 : i64} {
  func.func @_sinusoidal_kernel(%arg0: i32, %arg1: memref<2x4xf32, #tpu.memory_space<vmem>>, %arg2: memref<5x128xf32, #tpu.memory_space<vmem>>, %arg3: memref<2x128xf32, #tpu.memory_space<vmem>>) attributes {dimension_semantics = [#tpu.dimension_semantics<parallel>], iteration_bounds = array<i64: 1>, scalar_prefetch = 0 : i64, scratch_operands = 0 : i64, tpu.core_type = #tpu.core_type<tc>, window_params = [{transform_indices = @transform_0, window_bounds = array<i64: 2, 4>}, {pipeline_mode = #tpu.pipeline_mode<synchronous>, transform_indices = @transform_1, window_bounds = array<i64: 5, 128>}, {transform_indices = @transform_2, window_bounds = array<i64: 2, 128>}]} {
    %c0 = arith.constant 0 : index
    %c0_0 = arith.constant 0 : index
    %0 = vector.load %arg1[%c0, %c0_0] : memref<2x4xf32, #tpu.memory_space<vmem>>, vector<2x4xf32>
    %c0_1 = arith.constant 0 : index
    %c0_2 = arith.constant 0 : index
    %1 = vector.load %arg2[%c0_1, %c0_2] : memref<5x128xf32, #tpu.memory_space<vmem>>, vector<5x128xf32>
    %2 = vector.extract_strided_slice %0 {offsets = [0, 0], sizes = [2, 1], strides = [1, 1]} : vector<2x4xf32> to vector<2x1xf32>
    %3 = vector.extract_strided_slice %1 {offsets = [0, 0], sizes = [1, 128], strides = [1, 1]} : vector<5x128xf32> to vector<1x128xf32>
    %4 = vector.broadcast %2 : vector<2x1xf32> to vector<2x128xf32>
    %5 = vector.broadcast %3 : vector<1x128xf32> to vector<2x128xf32>
    %6 = arith.mulf %4, %5 : vector<2x128xf32>
    %7 = vector.extract_strided_slice %0 {offsets = [0, 1], sizes = [2, 1], strides = [1, 1]} : vector<2x4xf32> to vector<2x1xf32>
    %8 = vector.extract_strided_slice %1 {offsets = [1, 0], sizes = [1, 128], strides = [1, 1]} : vector<5x128xf32> to vector<1x128xf32>
    %9 = vector.broadcast %7 : vector<2x1xf32> to vector<2x128xf32>
    %10 = vector.broadcast %8 : vector<1x128xf32> to vector<2x128xf32>
    %11 = arith.mulf %9, %10 : vector<2x128xf32>
    %12 = arith.addf %6, %11 : vector<2x128xf32>
    %13 = vector.extract_strided_slice %0 {offsets = [0, 2], sizes = [2, 1], strides = [1, 1]} : vector<2x4xf32> to vector<2x1xf32>
    %14 = vector.extract_strided_slice %1 {offsets = [2, 0], sizes = [1, 128], strides = [1, 1]} : vector<5x128xf32> to vector<1x128xf32>
    %15 = vector.broadcast %13 : vector<2x1xf32> to vector<2x128xf32>
    %16 = vector.broadcast %14 : vector<1x128xf32> to vector<2x128xf32>
    %17 = arith.mulf %15, %16 : vector<2x128xf32>
    %18 = arith.addf %12, %17 : vector<2x128xf32>
    %19 = vector.extract_strided_slice %0 {offsets = [0, 3], sizes = [2, 1], strides = [1, 1]} : vector<2x4xf32> to vector<2x1xf32>
    %20 = vector.extract_strided_slice %1 {offsets = [3, 0], sizes = [1, 128], strides = [1, 1]} : vector<5x128xf32> to vector<1x128xf32>
    %21 = vector.broadcast %19 : vector<2x1xf32> to vector<2x128xf32>
    %22 = vector.broadcast %20 : vector<1x128xf32> to vector<2x128xf32>
    %23 = arith.mulf %21, %22 : vector<2x128xf32>
    %24 = arith.addf %18, %23 : vector<2x128xf32>
    %25 = vector.extract_strided_slice %1 {offsets = [4, 0], sizes = [1, 128], strides = [1, 1]} : vector<5x128xf32> to vector<1x128xf32>
    %26 = vector.broadcast %25 : vector<1x128xf32> to vector<2x128xf32>
    %27 = arith.addf %24, %26 : vector<2x128xf32>
    %28 = math.sin %27 : vector<2x128xf32>
    %c0_3 = arith.constant 0 : index
    %c0_4 = arith.constant 0 : index
    %29 = vector.load %arg3[%c0_3, %c0_4] : memref<2x128xf32, #tpu.memory_space<vmem>>, vector<2x128xf32>
    tpu.vector_store %arg3[%c0_3, %c0_4], %28 {strides = array<i32>} : memref<2x128xf32, #tpu.memory_space<vmem>>, vector<2x128xf32>,
    return
  }
  func.func @transform_0(%arg0: i32) -> (i32, i32) {
    %c0_i32 = arith.constant 0 : i32
    %c0_i32_0 = arith.constant 0 : i32
    return %arg0, %c0_i32 : i32, i32
  }
  func.func @transform_1(%arg0: i32) -> (i32, i32) {
    %c0_i32 = arith.constant 0 : i32
    %c0_i32_0 = arith.constant 0 : i32
    %c0_i32_1 = arith.constant 0 : i32
    return %c0_i32, %c0_i32_0 : i32, i32
  }
  func.func @transform_2(%arg0: i32) -> (i32, i32) {
    %c0_i32 = arith.constant 0 : i32
    %c0_i32_0 = arith.constant 0 : i32
    return %arg0, %c0_i32 : i32, i32
  }
}

</mosaic_0001>

<llo_original>
// kernel: tpu_custom_call.1
$region0: #{tpu_custom_call.1}
  #allocation0 [shape = 'u32[]', space=smem, size = 0x4, offset = 0x4, fixed_abs, tag = 'smem constant byte address 0x4 - core index']
  #allocation1 [shape = 'u32[144,128]{1,0:T(1,128)}', space=vmem, size = 0x12000, scoped, tag = 'internal scratch']
  %s0 = inlined_call_operand.hbm [shape: f32[2,4], index: 0, kind: input, shape index: {}]
  %s1 = inlined_call_operand.hbm [shape: f32[5,128], index: 1, kind: input, shape index: {}]
  %s2 = inlined_call_operand.hbm [shape: f32[2,128], index: 2, kind: output, shape index: {}]
  %s3 = sld [smem:[#allocation0]]
  $region26: #{tpu_custom_call.1} parent=0
    _
  %s5 = ssub.s32 1, %s3
  %s6 = scalar_select 0, %s5, %s3
  $region1: #{tpu_custom_call.1} parent=0
    #allocation2 [shape = 'u8[1024]{0}', space=vmem, size = 0x400, scoped, tag = 'input window, operand 0, single buffered']
    #allocation3 [shape = 's32[1]{0}', space=sflag, size = 0x4, scoped, tag = 'scoped memory for tpu_custom_call.1']
    #allocation4 [shape = 's32[1]{0}', space=sflag, size = 0x4, scoped, tag = 'scoped memory for tpu_custom_call.1']
    #allocation5 [shape = 'u8[4096]{0}', space=vmem, size = 0x1000, scoped, tag = 'input window, operand 1, single buffered']
    #allocation6 [shape = 's32[1]{0}', space=sflag, size = 0x4, scoped, tag = 'scoped memory for tpu_custom_call.1']
    #allocation7 [shape = 'u8[1024]{0}', space=vmem, size = 0x400, scoped, tag = 'output window, operand 0, single buffered']
    %7 = vsyncpa [#allocation3], 0
    %8 = vsyncpa [#allocation6], 0
    %9 = vsyncpa [#allocation4], 0
    // Predicated region
    $region2: #{tpu_custom_call.1} parent=1 // pred_check
      _
    $region3: #{tpu_custom_call.1} parent=1 // pred_check_branch
      %11 = sbr.rel (0) target = $region5
    $region4: #{tpu_custom_call.1} parent=1 // pred_region
      %s13 = ssub.s32 32, 32
      %14 = vsyncadd [#allocation3], %s13
      %s16 = sshll.u32 [#allocation2], 4
      %s17 = int_to_ptr.vmem [resolvable:$true] %s16
      %19 = dma.hbm_to_vmem [thread:$0]  %s0, 32, %s17, [#allocation3]
    $region5: #{tpu_custom_call.1} parent=1 // pred_fallthru
      _
    // Predicated region
    $region6: #{tpu_custom_call.1} parent=1 // pred_check
      _
    $region7: #{tpu_custom_call.1} parent=1 // pred_check_branch
      %21 = sbr.rel (0) target = $region9
    $region8: #{tpu_custom_call.1} parent=1 // pred_region
      %s23 = ssub.s32 128, 128
      %24 = vsyncadd [#allocation6], %s23
      %s26 = sshll.u32 [#allocation5], 4
      %s27 = int_to_ptr.vmem [resolvable:$true] %s26
      %29 = dma.hbm_to_vmem [thread:$0]  %s1, 128, %s27, [#allocation6]
    $region9: #{tpu_custom_call.1} parent=1 // pred_fallthru
      _
    // Predicated region
    $region10: #{tpu_custom_call.1} parent=1 // pred_check
      _
    $region11: #{tpu_custom_call.1} parent=1 // pred_check_branch
      %31 = sbr.rel (0) target = $region13
    $region12: #{tpu_custom_call.1} parent=1 // pred_region
      %32 = dma.done [#allocation3], 32
    $region13: #{tpu_custom_call.1} parent=1 // pred_fallthru
      _
    // Predicated region
    $region14: #{tpu_custom_call.1} parent=1 // pred_check
      _
    $region15: #{tpu_custom_call.1} parent=1 // pred_check_branch
      %34 = sbr.rel (0) target = $region17
    $region16: #{tpu_custom_call.1} parent=1 // pred_region
      %35 = dma.done [#allocation6], 128
    $region17: #{tpu_custom_call.1} parent=1 // pred_fallthru
      _
    %v36 = vld [vmem:[#allocation2] sm:$0x3]
    %v37 = vld [vmem:[#allocation5] sm:$0x1f]
    %39 = vset.pattern.permute.xlu0 0
    %40 = vperm.xlu0 %39, %v36
    %v41 = vpop.permute.xlu0 %40
    %v43 = vlaneseq
    %v44 = vshrl.u32 %v43, 7
    %v45 = vsub.s32 0, %v44
    %v46 = vrot.slane %v37, %v45
    %v47 = vmul.f32 %v41, %v46
    %48 = vset.pattern.permute.xlu0 1
    %49 = vperm.xlu0 %48, %v36
    %v50 = vpop.permute.xlu0 %49
    %v52 = vlaneseq
    %v53 = vshrl.u32 %v52, 7
    %v54 = vsub.s32 1, %v53
    %v55 = vrot.slane %v37, %v54
    %v56 = vmul.f32 %v50, %v55
    %v57 = vadd.f32 %v47, %v56
    %58 = vset.pattern.permute.xlu0 2
    %59 = vperm.xlu0 %58, %v36
    %v60 = vpop.permute.xlu0 %59
    %v62 = vlaneseq
    %v63 = vshrl.u32 %v62, 7
    %v64 = vsub.s32 2, %v63
    %v65 = vrot.slane %v37, %v64
    %v66 = vmul.f32 %v60, %v65
    %v67 = vadd.f32 %v57, %v66
    %68 = vset.pattern.permute.xlu0 3
    %69 = vperm.xlu0 %68, %v36
    %v70 = vpop.permute.xlu0 %69
    %v72 = vlaneseq
    %v73 = vshrl.u32 %v72, 7
    %v74 = vsub.s32 3, %v73
    %v75 = vrot.slane %v37, %v74
    %v76 = vmul.f32 %v70, %v75
    %v77 = vadd.f32 %v67, %v76
    %v78 = vlaneseq
    %v79 = vshrl.u32 %v78, 7
    %v80 = vsub.s32 4, %v79
    %v81 = vrot.slane %v37, %v80
    %v82 = vadd.f32 %v77, %v81
    %v83 = vand.u32 2147483647, %v82
    %vm84 = vcmp.le.f32.partialorder %v83, 0.7853982
    %vm85 = vcmp.lt.s32.totalorder %v82, 0
    %v86 = vand.u32 %v82, 2139095040
    %v87 = vshrl.u32 %v86, 23
    %v88 = vsub.s32 %v87, 127
    %v89 = vand.u32 2147483647, %v82
    %v90 = vand.u32 %v89, 8388607
    %v91 = vor.u32 %v90, 8388608
    %v92 = vsub.s32 0, %v91
    %v93 = vadd.s32 %v88, 1
    %vm94 = vcmp.gt.s32.totalorder %v93, 0
    %v95 = vsel %vm94, %v93, 0
    %v96 = vshrl.u32 %v95, 5
    %v97 = vand.u32 %v95, 31
    %v98 = vsub.s32 32, %v97
    %v99 = vshrl.u32 683565275, %v98
    %v100 = vshll.u32 683565275, %v97
    %v101 = vshrl.u32 2475754826, %v98
    %v102 = vor.u32 %v100, %v101
    %v103 = vshll.u32 2475754826, %v97
    %v104 = vshrl.u32 2131351028, %v98
    %v105 = vor.u32 %v103, %v104
    %v106 = vshll.u32 2131351028, %v97
    %v107 = vshrl.u32 2102212464, %v98
    %v108 = vor.u32 %v106, %v107
    %v109 = vshll.u32 2102212464, %v97
    %v110 = vshrl.u32 920167782, %v98
    %v111 = vor.u32 %v109, %v110
    %v112 = vshll.u32 920167782, %v97
    %v113 = vshrl.u32 1326507024, %v98
    %v114 = vor.u32 %v112, %v113
    %vm115 = vcmp.lt.s32.totalorder %v96, 1
    %vm116 = vcmp.lt.s32.totalorder %v96, 2
    %vm117 = vcmp.lt.s32.totalorder %v96, 3
    %vm118 = vcmp.lt.s32.totalorder %v96, 4
    %v119 = vsel %vm115, %v99, %v102
    %v120 = vsel %vm118, %v108, 2102212464
    %v121 = vsel %vm117, %v105, %v120
    %v122 = vsel %vm116, %v119, %v121
    %v123 = vsel %vm115, %v102, %v105
    %v124 = vsel %vm118, %v111, 920167782
    %v125 = vsel %vm117, %v108, %v124
    %v126 = vsel %vm116, %v123, %v125
    %v127 = vsel %vm115, %v105, %v108
    %v128 = vsel %vm118, %v114, 1326507024
    %v129 = vsel %vm117, %v111, %v128
    %v130 = vsel %vm116, %v127, %v129
    %v131 = vshll.u32 %v91, 8
    %v132 = vmul.u32.u64.compose %v131, %v130
    %v133 = vextract.low.u32 %v132
    %v134 = vextract.high.u32 %v132
    %v135 = vmul.u32.u64.compose %v131, %v126
    %v136 = vextract.low.u32 %v135
    %v137 = vextract.high.u32 %v135
    %v138 = vmul.u32 %v131, %v122
    %v139 = vadd.s32 %v134, %v136
    %vm140 = vc.u32 %v134, %v136
    %v141 = vadd.s32 %v137, 1
    %v142 = vsel %vm140, %v141, %v137
    %v143 = vadd.s32 %v138, %v142
    %v144 = vadd.s32 %v143, 536870912
    %v145 = vshrl.u32 %v144, 30
    %v146 = vshll.u32 %v145, 30
    %v147 = vsub.s32 %v143, %v146
    %vm148 = vcmp.lt.s32.totalorder %v147, 0
    %v149 = vsub.s32 0, %v147
    %v150 = vsel %vm148, %v149, %v147
    %v151 = vclz %v150
    %v152 = vsub.s32 %v151, 2
    %vm153 = vcmp.gt.s32.totalorder 0, %v152
    %v154 = vsel %vm153, 0, %v152
    %v155 = vsub.s32 32, %v154
    %v156 = vshll.u32 %v147, %v154
    %v157 = vshrl.u32 %v139, %v155
    %v158 = vor.u32 %v156, %v157
    %v159 = vsub.s32 4294967266, %v154
    %v160 = vadd.s32 %v159, 127
    %v161 = vshll.u32 %v160, 23
    %v162 = vor.u32 4788187, %v161
    %v163 = vand.u32 2147483647, %v162
    %v165 = vcvt.s32.f32 %v158
    %v166 = vmul.f32 %v165, %v163
    %v167 = vxor.u32 %v166, 2147483648
    %v168 = vsel %vm85, %v167, %v166
    %v169 = vsub.s32 4, %v145
    %v170 = vsel %vm85, %v169, %v145
    %v171 = vsel %vm84, %v82, %v168
    %v172 = vsel %vm84, 0, %v170
    %v173 = vcosq.f32.pop %v171
    %v174 = vsinq.f32.pop %v171
    %vm175 = vweird.f32 %v82
    %v176 = vadd.s32 %v172, 3
    %v177 = vand.u32 %v176, 3
    %vm178 = vcmp.lt.s32.totalorder %v177, 2
    %vm179 = vcmp.eq.s32.totalorder %v177, 0
    %v180 = vxor.u32 %v174, 2147483648
    %v181 = vsel %vm179, %v173, %v180
    %vm182 = vcmp.eq.s32.totalorder %v177, 2
    %v183 = vxor.u32 %v173, 2147483648
    %v184 = vsel %vm182, %v183, %v174
    %v185 = vsel %vm178, %v181, %v184
    %v186 = vsel %vm175, nan, %v185
    %187 = vst [vmem:[#allocation7] sm:$0x3] %v186
    // Predicated region
    $region18: #{tpu_custom_call.1} parent=1 // pred_check
      _
    $region19: #{tpu_custom_call.1} parent=1 // pred_check_branch
      %189 = sbr.rel (0) target = $region21
    $region20: #{tpu_custom_call.1} parent=1 // pred_region
      %s191 = ssub.s32 32, 32
      %192 = vsyncadd [#allocation4], %s191
      %s194 = sshll.u32 [#allocation7], 4
      %s195 = int_to_ptr.vmem [resolvable:$true] %s194
      %197 = dma.vmem_to_hbm [thread:$0]  %s195, 32, %s2, [#allocation4]
    $region21: #{tpu_custom_call.1} parent=1 // pred_fallthru
      _
    // Predicated region
    $region22: #{tpu_custom_call.1} parent=1 // pred_check
      _
    $region23: #{tpu_custom_call.1} parent=1 // pred_check_branch
      %199 = sbr.rel (0) target = $region25
    $region24: #{tpu_custom_call.1} parent=1 // pred_region
      %200 = dma.done [#allocation4], 32
    $region25: #{tpu_custom_call.1} parent=1 // pred_fallthru
      _
    %201 = vsyncpa [#allocation3], 1
    %202 = vsyncpa [#allocation6], 1
    %203 = vsyncpa [#allocation4], 1

</llo_original>
